<compile_context>
chip_gen: v6e
topology: v6e:2x2x1
jax: 0.10.0
libtpu: 0.0.40
codegen_flags: <defaults>
</compile_context>

<pallas_src>
import numpy as np
import jax
import jax.numpy as jnp
from jax.experimental import pallas as pl
from jax.experimental.pallas import tpu as pltpu

HIDDEN_DIM = 64
INPUT_DIM = 2


def affine_coupling_kernel(xt_ref, w1_ref, b1_ref, w2_ref, b2_ref,
                           w3_ref, b3_ref, yt_ref, logdet_ref):
    # xt_ref: (C, TB) with batch on lanes.  Weights in PyTorch (out, in)
    # layout so the transposed-layout matmul is simply h = W @ x + b.
    d = xt_ref.shape[0] // 2
    xa = xt_ref[0:d, :]                     # (d, TB)
    xb = xt_ref[d:, :]                      # (d, TB)

    # Layer 1: K == d.  For d == 1 this is an outer product -> VPU broadcast
    # multiply (the MXU would pad K to 128/256 for <1% utilization).
    if d == 1:
        h1 = w1_ref[...] * xa + b1_ref[...]            # (H,1)*(1,TB) -> (H,TB)
    else:
        h1 = jnp.dot(w1_ref[...], xa,
                     preferred_element_type=jnp.float32) + b1_ref[...]
    h1 = jnp.maximum(h1, 0.0)

    # Layers 2/3: MXU matmuls with N = batch tile (lane-dense).
    h2 = jnp.dot(w2_ref[...], h1,
                 preferred_element_type=jnp.float32) + b2_ref[...]        # (H, TB)
    h2 = jnp.maximum(h2, 0.0)
    params = jnp.dot(w3_ref[...], h2,
                     preferred_element_type=jnp.float32) + b3_ref[...]    # (2d, TB)

    s = jnp.tanh(params[0:d, :])            # (d, TB)
    t = params[d:, :]                       # (d, TB)
    xb_new = xb * jnp.exp(s) + t

    # Two direct lane-dense stores instead of a lane-axis concatenate.
    yt_ref[0:d, :] = xa.astype(yt_ref.dtype)
    yt_ref[d:, :] = xb_new.astype(yt_ref.dtype)

    if d == 1:
        logdet_ref[...] = s                 # single row -> no cross-lane reduce
    else:
        logdet_ref[...] = jnp.sum(s, axis=0, keepdims=True)


def affine_coupling(x, w1, b1, w2, b2, w3, b3, *, batch_tile=None):
    """RealNVP affine-coupling forward.

    x: (B, C) float32.  wN: PyTorch-layout (out_features, in_features),
    bN: (out_features,).  Returns (y: (B, C), log_det: (B,)).
    """
    B, C = x.shape
    assert C % 2 == 0, "AffineCoupling requires an even feature dimension"
    d = C // 2
    H = w1.shape[0]

    # Layout plumbing only: put batch on the lane axis for the kernel.
    xt = x.T                                # (C, B)
    b1c = b1.reshape(H, 1)
    b2c = b2.reshape(H, 1)
    b3c = b3.reshape(2 * d, 1)

    # Batch tile: whole batch if small (block == full array satisfies the
    # lane constraint), else 1024-lane tiles (multiple of 128).
    if batch_tile is None:
        TB = B if B <= 1024 else 1024
    else:
        TB = batch_tile
    grid = (pl.cdiv(B, TB),)

    const = lambda i: (0, 0)
    yt, logdet = pl.pallas_call(
        affine_coupling_kernel,
        out_shape=(jax.ShapeDtypeStruct((C, B), x.dtype),
                   jax.ShapeDtypeStruct((1, B), jnp.float32)),
        grid_spec=pltpu.PrefetchScalarGridSpec(
            num_scalar_prefetch=0,
            grid=grid,
            in_specs=[
                pl.BlockSpec((C, TB), lambda i: (0, i)),      # x  (batch-tiled)
                pl.BlockSpec((H, d), const),                  # w1 (resident)
                pl.BlockSpec((H, 1), const),                  # b1
                pl.BlockSpec((H, H), const),                  # w2
                pl.BlockSpec((H, 1), const),                  # b2
                pl.BlockSpec((2 * d, H), const),              # w3
                pl.BlockSpec((2 * d, 1), const),              # b3
            ],
            out_specs=(
                pl.BlockSpec((C, TB), lambda i: (0, i)),      # y
                pl.BlockSpec((1, TB), lambda i: (0, i)),      # log_det
            ),
        ),
        compiler_params=pltpu.CompilerParams(
            dimension_semantics=("parallel",)),   # batch axis is embarrassingly parallel
    )(xt, w1, b1c, w2, b2c, w3, b3c)

    return yt.T, logdet[0]


def _reference(x, w1, b1, w2, b2, w3, b3):
    d = x.shape[1] // 2
    xa, xb = x[:, :d], x[:, d:]
    h1 = jnp.maximum(xa @ w1.T + b1, 0.0)
    h2 = jnp.maximum(h1 @ w2.T + b2, 0.0)
    params = h2 @ w3.T + b3
    s = jnp.tanh(params[:, :d])
    t = params[:, d:]
    y = jnp.concatenate([xa, xb * jnp.exp(s) + t], axis=1)
    return y, jnp.sum(s, axis=1)


if __name__ == "__main__":
    key = jax.random.PRNGKey(0)
    keys = jax.random.split(key, 8)
    d = INPUT_DIM // 2

    def init_linear(kw, kb, fan_in, fan_out):
        # PyTorch nn.Linear default init: U(-1/sqrt(fan_in), 1/sqrt(fan_in));
        # weights kept in PyTorch (out_features, in_features) layout.
        bound = 1.0 / float(np.sqrt(fan_in))
        w = jax.random.uniform(kw, (fan_out, fan_in), jnp.float32, -bound, bound)
        b = jax.random.uniform(kb, (fan_out,), jnp.float32, -bound, bound)
        return w, b

    w1, b1 = init_linear(keys[0], keys[1], d, HIDDEN_DIM)
    w2, b2 = init_linear(keys[2], keys[3], HIDDEN_DIM, HIDDEN_DIM)
    w3, b3 = init_linear(keys[4], keys[5], HIDDEN_DIM, 2 * d)

    # Small primary test (single grid step).
    B = 8
    x = jax.random.normal(keys[6], (B, INPUT_DIM), jnp.float32)
    y, log_det = affine_coupling(x, w1, b1, w2, b2, w3, b3)
    jax.block_until_ready((y, log_det))
    y_ref, ld_ref = _reference(x, w1, b1, w2, b2, w3, b3)
    np.testing.assert_allclose(np.asarray(y), np.asarray(y_ref), rtol=1e-5, atol=1e-5)
    np.testing.assert_allclose(np.asarray(log_det), np.asarray(ld_ref), rtol=1e-5, atol=1e-5)

    # Secondary test exercising the multi-step batch grid with resident weights.
    B2 = 512
    x2 = jax.random.normal(keys[7], (B2, INPUT_DIM), jnp.float32)
    y2, ld2 = affine_coupling(x2, w1, b1, w2, b2, w3, b3, batch_tile=128)
    jax.block_until_ready((y2, ld2))
    y2_ref, ld2_ref = _reference(x2, w1, b1, w2, b2, w3, b3)
    np.testing.assert_allclose(np.asarray(y2), np.asarray(y2_ref), rtol=1e-5, atol=1e-5)
    np.testing.assert_allclose(np.asarray(ld2), np.asarray(ld2_ref), rtol=1e-5, atol=1e-5)

    print("KERNEL_OK")
</pallas_src>

<mosaic_0001>
module attributes {stable_mosaic.version = 11 : i64} {
  func.func @affine_coupling_kernel(%arg0: i32, %arg1: memref<2x8xf32, #tpu.memory_space<vmem>>, %arg2: memref<64x1xf32, #tpu.memory_space<vmem>>, %arg3: memref<64x1xf32, #tpu.memory_space<vmem>>, %arg4: memref<64x64xf32, #tpu.memory_space<vmem>>, %arg5: memref<64x1xf32, #tpu.memory_space<vmem>>, %arg6: memref<2x64xf32, #tpu.memory_space<vmem>>, %arg7: memref<2x1xf32, #tpu.memory_space<vmem>>, %arg8: memref<2x8xf32, #tpu.memory_space<vmem>>, %arg9: memref<1x8xf32, #tpu.memory_space<vmem>>) attributes {dimension_semantics = [#tpu.dimension_semantics<parallel>], iteration_bounds = array<i64: 1>, scalar_prefetch = 0 : i64, scratch_operands = 0 : i64, tpu.core_type = #tpu.core_type<tc>, window_params = [{transform_indices = @transform_0, window_bounds = array<i64: 2, 8>}, {pipeline_mode = #tpu.pipeline_mode<synchronous>, transform_indices = @transform_1, window_bounds = array<i64: 64, 1>}, {pipeline_mode = #tpu.pipeline_mode<synchronous>, transform_indices = @transform_2, window_bounds = array<i64: 64, 1>}, {pipeline_mode = #tpu.pipeline_mode<synchronous>, transform_indices = @transform_3, window_bounds = array<i64: 64, 64>}, {pipeline_mode = #tpu.pipeline_mode<synchronous>, transform_indices = @transform_4, window_bounds = array<i64: 64, 1>}, {pipeline_mode = #tpu.pipeline_mode<synchronous>, transform_indices = @transform_5, window_bounds = array<i64: 2, 64>}, {pipeline_mode = #tpu.pipeline_mode<synchronous>, transform_indices = @transform_6, window_bounds = array<i64: 2, 1>}, {transform_indices = @transform_7, window_bounds = array<i64: 2, 8>}, {transform_indices = @transform_8, window_bounds = array<i64: 1, 8>}]} {
    %c0 = arith.constant 0 : index
    %c0_0 = arith.constant 0 : index
    %0 = vector.load %arg1[%c0, %c0_0] : memref<2x8xf32, #tpu.memory_space<vmem>>, vector<1x8xf32>
    %c1 = arith.constant 1 : index
    %c0_1 = arith.constant 0 : index
    %1 = vector.load %arg1[%c1, %c0_1] : memref<2x8xf32, #tpu.memory_space<vmem>>, vector<1x8xf32>
    %c0_2 = arith.constant 0 : index
    %c0_3 = arith.constant 0 : index
    %2 = vector.load %arg2[%c0_2, %c0_3] : memref<64x1xf32, #tpu.memory_space<vmem>>, vector<64x1xf32>
    %3 = vector.broadcast %2 : vector<64x1xf32> to vector<64x8xf32>
    %4 = vector.broadcast %0 : vector<1x8xf32> to vector<64x8xf32>
    %5 = arith.mulf %3, %4 : vector<64x8xf32>
    %c0_4 = arith.constant 0 : index
    %c0_5 = arith.constant 0 : index
    %6 = vector.load %arg3[%c0_4, %c0_5] : memref<64x1xf32, #tpu.memory_space<vmem>>, vector<64x1xf32>
    %7 = vector.broadcast %6 : vector<64x1xf32> to vector<64x8xf32>
    %8 = arith.addf %5, %7 : vector<64x8xf32>
    %cst = arith.constant 0.000000e+00 : f32
    %9 = vector.broadcast %cst : f32 to vector<64x8xf32>
    %10 = arith.maximumf %8, %9 : vector<64x8xf32>
    %c0_6 = arith.constant 0 : index
    %c0_7 = arith.constant 0 : index
    %11 = vector.load %arg4[%c0_6, %c0_7] : memref<64x64xf32, #tpu.memory_space<vmem>>, vector<64x64xf32>
    %cst_8 = arith.constant dense<0.000000e+00> : vector<64x8xf32>
    %12 = tpu.matmul %11, %10, %cst_8 {dimension_numbers = #tpu.dot_dimension_numbers<[1], [0], [0], [1], [0, 0, 1, 1], [], []>} : vector<64x64xf32>, vector<64x8xf32>, vector<64x8xf32> -> vector<64x8xf32>
    %c0_9 = arith.constant 0 : index
    %c0_10 = arith.constant 0 : index
    %13 = vector.load %arg5[%c0_9, %c0_10] : memref<64x1xf32, #tpu.memory_space<vmem>>, vector<64x1xf32>
    %14 = vector.broadcast %13 : vector<64x1xf32> to vector<64x8xf32>
    %15 = arith.addf %12, %14 : vector<64x8xf32>
    %cst_11 = arith.constant 0.000000e+00 : f32
    %16 = vector.broadcast %cst_11 : f32 to vector<64x8xf32>
    %17 = arith.maximumf %15, %16 : vector<64x8xf32>
    %c0_12 = arith.constant 0 : index
    %c0_13 = arith.constant 0 : index
    %18 = vector.load %arg6[%c0_12, %c0_13] : memref<2x64xf32, #tpu.memory_space<vmem>>, vector<2x64xf32>
    %cst_14 = arith.constant dense<0.000000e+00> : vector<2x8xf32>
    %19 = tpu.matmul %18, %17, %cst_14 {dimension_numbers = #tpu.dot_dimension_numbers<[1], [0], [0], [1], [0, 0, 1, 1], [], []>} : vector<2x64xf32>, vector<64x8xf32>, vector<2x8xf32> -> vector<2x8xf32>
    %c0_15 = arith.constant 0 : index
    %c0_16 = arith.constant 0 : index
    %20 = vector.load %arg7[%c0_15, %c0_16] : memref<2x1xf32, #tpu.memory_space<vmem>>, vector<2x1xf32>
    %21 = vector.broadcast %20 : vector<2x1xf32> to vector<2x8xf32>
    %22 = arith.addf %19, %21 : vector<2x8xf32>
    %23 = vector.extract_strided_slice %22 {offsets = [0, 0], sizes = [1, 8], strides = [1, 1]} : vector<2x8xf32> to vector<1x8xf32>
    %24 = math.tanh %23 : vector<1x8xf32>
    %25 = vector.extract_strided_slice %22 {offsets = [1, 0], sizes = [1, 8], strides = [1, 1]} : vector<2x8xf32> to vector<1x8xf32>
    %26 = math.exp %24 : vector<1x8xf32>
    %27 = arith.mulf %1, %26 : vector<1x8xf32>
    %28 = arith.addf %27, %25 : vector<1x8xf32>
    %c0_17 = arith.constant 0 : index
    %c0_18 = arith.constant 0 : index
    %29 = vector.load %arg8[%c0_17, %c0_18] : memref<2x8xf32, #tpu.memory_space<vmem>>, vector<1x8xf32>
    tpu.vector_store %arg8[%c0_17, %c0_18], %0 {strides = array<i32>} : memref<2x8xf32, #tpu.memory_space<vmem>>, vector<1x8xf32>,
    %c1_19 = arith.constant 1 : index
    %c0_20 = arith.constant 0 : index
    %30 = vector.load %arg8[%c1_19, %c0_20] : memref<2x8xf32, #tpu.memory_space<vmem>>, vector<1x8xf32>
    tpu.vector_store %arg8[%c1_19, %c0_20], %28 {strides = array<i32>} : memref<2x8xf32, #tpu.memory_space<vmem>>, vector<1x8xf32>,
    %c0_21 = arith.constant 0 : index
    %c0_22 = arith.constant 0 : index
    %31 = vector.load %arg9[%c0_21, %c0_22] : memref<1x8xf32, #tpu.memory_space<vmem>>, vector<1x8xf32>
    tpu.vector_store %arg9[%c0_21, %c0_22], %24 {strides = array<i32>} : memref<1x8xf32, #tpu.memory_space<vmem>>, vector<1x8xf32>,
    return
  }
  func.func @transform_0(%arg0: i32) -> (i32, i32) {
    %c0_i32 = arith.constant 0 : i32
    %c0_i32_0 = arith.constant 0 : i32
    return %c0_i32, %arg0 : i32, i32
  }
  func.func @transform_1(%arg0: i32) -> (i32, i32) {
    %c0_i32 = arith.constant 0 : i32
    %c0_i32_0 = arith.constant 0 : i32
    %c0_i32_1 = arith.constant 0 : i32
    return %c0_i32, %c0_i32_0 : i32, i32
  }
  func.func @transform_2(%arg0: i32) -> (i32, i32) {
    %c0_i32 = arith.constant 0 : i32
    %c0_i32_0 = arith.constant 0 : i32
    %c0_i32_1 = arith.constant 0 : i32
    return %c0_i32, %c0_i32_0 : i32, i32
  }
  func.func @transform_3(%arg0: i32) -> (i32, i32) {
    %c0_i32 = arith.constant 0 : i32
    %c0_i32_0 = arith.constant 0 : i32
    %c0_i32_1 = arith.constant 0 : i32
    return %c0_i32, %c0_i32_0 : i32, i32
  }
  func.func @transform_4(%arg0: i32) -> (i32, i32) {
    %c0_i32 = arith.constant 0 : i32
    %c0_i32_0 = arith.constant 0 : i32
    %c0_i32_1 = arith.constant 0 : i32
    return %c0_i32, %c0_i32_0 : i32, i32
  }
  func.func @transform_5(%arg0: i32) -> (i32, i32) {
    %c0_i32 = arith.constant 0 : i32
    %c0_i32_0 = arith.constant 0 : i32
    %c0_i32_1 = arith.constant 0 : i32
    return %c0_i32, %c0_i32_0 : i32, i32
  }
  func.func @transform_6(%arg0: i32) -> (i32, i32) {
    %c0_i32 = arith.constant 0 : i32
    %c0_i32_0 = arith.constant 0 : i32
    %c0_i32_1 = arith.constant 0 : i32
    return %c0_i32, %c0_i32_0 : i32, i32
  }
  func.func @transform_7(%arg0: i32) -> (i32, i32) {
    %c0_i32 = arith.constant 0 : i32
    %c0_i32_0 = arith.constant 0 : i32
    return %c0_i32, %arg0 : i32, i32
  }
  func.func @transform_8(%arg0: i32) -> (i32, i32) {
    %c0_i32 = arith.constant 0 : i32
    %c0_i32_0 = arith.constant 0 : i32
    return %c0_i32, %arg0 : i32, i32
  }
}

</mosaic_0001>

<llo_original>
// kernel: tpu_custom_call.1
$region0: #{tpu_custom_call.1}
  #allocation0 [shape = 'u32[]', space=smem, size = 0x4, offset = 0x4, fixed_abs, tag = 'smem constant byte address 0x4 - core index']
  #allocation1 [shape = 'u32[144,128]{1,0:T(1,128)}', space=vmem, size = 0x12000, scoped, tag = 'internal scratch']
  %s0 = inlined_call_operand.vmem [shape: f32[2,8], index: 0, kind: input, shape index: {}]
  %s1 = inlined_call_operand.vmem [shape: f32[64,1], index: 1, kind: input, shape index: {}]
  %s2 = inlined_call_operand.vmem [shape: f32[64,1], index: 2, kind: input, shape index: {}]
  %s3 = inlined_call_operand.vmem [shape: f32[64,64], index: 3, kind: input, shape index: {}]
  %s4 = inlined_call_operand.vmem [shape: f32[64,1], index: 4, kind: input, shape index: {}]
  %s5 = inlined_call_operand.vmem [shape: f32[2,64], index: 5, kind: input, shape index: {}]
  %s6 = inlined_call_operand.vmem [shape: f32[2,1], index: 6, kind: input, shape index: {}]
  %s7 = inlined_call_operand.hbm [shape: f32[2,8], index: 7, kind: output, shape index: {0}]
  %s8 = inlined_call_operand.hbm [shape: f32[1,8], index: 8, kind: output, shape index: {1}]
  %9 = xla_tuple %s7, %s8
  %s10 = sld [smem:[#allocation0]]
  $region46: #{tpu_custom_call.1} parent=0
    _
  %s12 = ssub.s32 1, %s10
  %s13 = scalar_select 0, %s12, %s10
  $region1: #{tpu_custom_call.1} parent=0
    #allocation2 [shape = 'u8[1024]{0}', space=vmem, size = 0x400, scoped, tag = 'output window, operand 0, single buffered']
    #allocation3 [shape = 's32[1]{0}', space=sflag, size = 0x4, scoped, tag = 'scoped memory for tpu_custom_call.1']
    #allocation4 [shape = 'u8[512]{0}', space=vmem, size = 0x400, scoped, tag = 'output window, operand 1, single buffered']
    #allocation5 [shape = 's32[1]{0}', space=sflag, size = 0x4, scoped, tag = 'scoped memory for tpu_custom_call.1']
    %14 = vsyncpa [#allocation3], 0
    %15 = vsyncpa [#allocation5], 0
    // Predicated region
    $region2: #{tpu_custom_call.1} parent=1 // pred_check
      _
    $region3: #{tpu_custom_call.1} parent=1 // pred_check_branch
      %17 = sbr.rel (0) target = $region5
    $region4: #{tpu_custom_call.1} parent=1 // pred_region
      _
    $region5: #{tpu_custom_call.1} parent=1 // pred_fallthru
      _
    // Predicated region
    $region6: #{tpu_custom_call.1} parent=1 // pred_check
      _
    $region7: #{tpu_custom_call.1} parent=1 // pred_check_branch
      %19 = sbr.rel (0) target = $region9
    $region8: #{tpu_custom_call.1} parent=1 // pred_region
      _
    $region9: #{tpu_custom_call.1} parent=1 // pred_fallthru
      _
    // Predicated region
    $region10: #{tpu_custom_call.1} parent=1 // pred_check
      _
    $region11: #{tpu_custom_call.1} parent=1 // pred_check_branch
      %21 = sbr.rel (0) target = $region13
    $region12: #{tpu_custom_call.1} parent=1 // pred_region
      _
    $region13: #{tpu_custom_call.1} parent=1 // pred_fallthru
      _
    // Predicated region
    $region14: #{tpu_custom_call.1} parent=1 // pred_check
      _
    $region15: #{tpu_custom_call.1} parent=1 // pred_check_branch
      %23 = sbr.rel (0) target = $region17
    $region16: #{tpu_custom_call.1} parent=1 // pred_region
      _
    $region17: #{tpu_custom_call.1} parent=1 // pred_fallthru
      _
    // Predicated region
    $region18: #{tpu_custom_call.1} parent=1 // pred_check
      _
    $region19: #{tpu_custom_call.1} parent=1 // pred_check_branch
      %25 = sbr.rel (0) target = $region21
    $region20: #{tpu_custom_call.1} parent=1 // pred_region
      _
    $region21: #{tpu_custom_call.1} parent=1 // pred_fallthru
      _
    // Predicated region
    $region22: #{tpu_custom_call.1} parent=1 // pred_check
      _
    $region23: #{tpu_custom_call.1} parent=1 // pred_check_branch
      %27 = sbr.rel (0) target = $region25
    $region24: #{tpu_custom_call.1} parent=1 // pred_region
      _
    $region25: #{tpu_custom_call.1} parent=1 // pred_fallthru
      _
    // Predicated region
    $region26: #{tpu_custom_call.1} parent=1 // pred_check
      _
    $region27: #{tpu_custom_call.1} parent=1 // pred_check_branch
      %29 = sbr.rel (0) target = $region29
    $region28: #{tpu_custom_call.1} parent=1 // pred_region
      _
    $region29: #{tpu_custom_call.1} parent=1 // pred_fallthru
      _
    %v30 = vld [vmem:[%s0] sm:$0x1]
    %v31 = vld [vmem:[%s0 + $0x1] sm:$0x1]
    %v32 = vld [vmem:[%s1] sm:$0xff]
    %v33 = vld [vmem:[%s1 + $0x8] sm:$0xff]
    %v34 = vld [vmem:[%s1 + $0x10] sm:$0xff]
    %v35 = vld [vmem:[%s1 + $0x18] sm:$0xff]
    %v36 = vld [vmem:[%s1 + $0x20] sm:$0xff]
    %v37 = vld [vmem:[%s1 + $0x28] sm:$0xff]
    %v38 = vld [vmem:[%s1 + $0x30] sm:$0xff]
    %v39 = vld [vmem:[%s1 + $0x38] sm:$0xff]
    %41 = vset.pattern.permute.xlu0 0
    %42 = vperm.xlu0 %41, %v32
    %v43 = vpop.permute.xlu0 %42
    %46 = vset.pattern.permute.xlu0 0
    %47 = vperm.xlu0 %46, %v33
    %v48 = vpop.permute.xlu0 %47
    %51 = vset.pattern.permute.xlu0 0
    %52 = vperm.xlu0 %51, %v34
    %v53 = vpop.permute.xlu0 %52
    %56 = vset.pattern.permute.xlu0 0
    %57 = vperm.xlu0 %56, %v35
    %v58 = vpop.permute.xlu0 %57
    %61 = vset.pattern.permute.xlu0 0
    %62 = vperm.xlu0 %61, %v36
    %v63 = vpop.permute.xlu0 %62
    %66 = vset.pattern.permute.xlu0 0
    %67 = vperm.xlu0 %66, %v37
    %v68 = vpop.permute.xlu0 %67
    %71 = vset.pattern.permute.xlu0 0
    %72 = vperm.xlu0 %71, %v38
    %v73 = vpop.permute.xlu0 %72
    %76 = vset.pattern.permute.xlu0 0
    %77 = vperm.xlu0 %76, %v39
    %v78 = vpop.permute.xlu0 %77
    %v80 = vlaneseq
    %v81 = vshrl.u32 %v80, 7
    %v82 = vsub.s32 0, %v81
    %v83 = vrot.slane %v30, %v82
    %v84 = vmul.f32 %v43, %v83
    %v85 = vmul.f32 %v48, %v83
    %v86 = vmul.f32 %v53, %v83
    %v87 = vmul.f32 %v58, %v83
    %v88 = vmul.f32 %v63, %v83
    %v89 = vmul.f32 %v68, %v83
    %v90 = vmul.f32 %v73, %v83
    %v91 = vmul.f32 %v78, %v83
    %v92 = vld [vmem:[%s2] sm:$0xff]
    %v93 = vld [vmem:[%s2 + $0x8] sm:$0xff]
    %v94 = vld [vmem:[%s2 + $0x10] sm:$0xff]
    %v95 = vld [vmem:[%s2 + $0x18] sm:$0xff]
    %v96 = vld [vmem:[%s2 + $0x20] sm:$0xff]
    %v97 = vld [vmem:[%s2 + $0x28] sm:$0xff]
    %v98 = vld [vmem:[%s2 + $0x30] sm:$0xff]
    %v99 = vld [vmem:[%s2 + $0x38] sm:$0xff]
    %101 = vset.pattern.permute.xlu0 0
    %102 = vperm.xlu0 %101, %v92
    %v103 = vpop.permute.xlu0 %102
    %106 = vset.pattern.permute.xlu0 0
    %107 = vperm.xlu0 %106, %v93
    %v108 = vpop.permute.xlu0 %107
    %111 = vset.pattern.permute.xlu0 0
    %112 = vperm.xlu0 %111, %v94
    %v113 = vpop.permute.xlu0 %112
    %116 = vset.pattern.permute.xlu0 0
    %117 = vperm.xlu0 %116, %v95
    %v118 = vpop.permute.xlu0 %117
    %121 = vset.pattern.permute.xlu0 0
    %122 = vperm.xlu0 %121, %v96
    %v123 = vpop.permute.xlu0 %122
    %126 = vset.pattern.permute.xlu0 0
    %127 = vperm.xlu0 %126, %v97
    %v128 = vpop.permute.xlu0 %127
    %131 = vset.pattern.permute.xlu0 0
    %132 = vperm.xlu0 %131, %v98
    %v133 = vpop.permute.xlu0 %132
    %136 = vset.pattern.permute.xlu0 0
    %137 = vperm.xlu0 %136, %v99
    %v138 = vpop.permute.xlu0 %137
    %v140 = vadd.f32 %v84, %v103
    %v141 = vadd.f32 %v85, %v108
    %v142 = vadd.f32 %v86, %v113
    %v143 = vadd.f32 %v87, %v118
    %v144 = vadd.f32 %v88, %v123
    %v145 = vadd.f32 %v89, %v128
    %v146 = vadd.f32 %v90, %v133
    %v147 = vadd.f32 %v91, %v138
    %v148 = vmax.f32 %v140, 0.0
    %v149 = vmax.f32 %v141, 0.0
    %v150 = vmax.f32 %v142, 0.0
    %v151 = vmax.f32 %v143, 0.0
    %v152 = vmax.f32 %v144, 0.0
    %v153 = vmax.f32 %v145, 0.0
    %v154 = vmax.f32 %v146, 0.0
    %v155 = vmax.f32 %v147, 0.0
    %v156 = vld [vmem:[%s3] sm:$0xff]
    %v157 = vld [vmem:[%s3 + $0x8] sm:$0xff]
    %v158 = vld [vmem:[%s3 + $0x10] sm:$0xff]
    %v159 = vld [vmem:[%s3 + $0x18] sm:$0xff]
    %v160 = vld [vmem:[%s3 + $0x20] sm:$0xff]
    %v161 = vld [vmem:[%s3 + $0x28] sm:$0xff]
    %v162 = vld [vmem:[%s3 + $0x30] sm:$0xff]
    %v163 = vld [vmem:[%s3 + $0x38] sm:$0xff]
    %v164 = vld [vmem:[%s4] sm:$0xff]
    %v165 = vld [vmem:[%s4 + $0x8] sm:$0xff]
    %v166 = vld [vmem:[%s4 + $0x10] sm:$0xff]
    %v167 = vld [vmem:[%s4 + $0x18] sm:$0xff]
    %v168 = vld [vmem:[%s4 + $0x20] sm:$0xff]
    %v169 = vld [vmem:[%s4 + $0x28] sm:$0xff]
    %v170 = vld [vmem:[%s4 + $0x30] sm:$0xff]
    %v171 = vld [vmem:[%s4 + $0x38] sm:$0xff]
    %173 = vset.pattern.permute.xlu0 0
    %174 = vperm.xlu0 %173, %v164
    %v175 = vpop.permute.xlu0 %174
    %178 = vset.pattern.permute.xlu0 0
    %179 = vperm.xlu0 %178, %v165
    %v180 = vpop.permute.xlu0 %179
    %183 = vset.pattern.permute.xlu0 0
    %184 = vperm.xlu0 %183, %v166
    %v185 = vpop.permute.xlu0 %184
    %188 = vset.pattern.permute.xlu0 0
    %189 = vperm.xlu0 %188, %v167
    %v190 = vpop.permute.xlu0 %189
    %193 = vset.pattern.permute.xlu0 0
    %194 = vperm.xlu0 %193, %v168
    %v195 = vpop.permute.xlu0 %194
    %198 = vset.pattern.permute.xlu0 0
    %199 = vperm.xlu0 %198, %v169
    %v200 = vpop.permute.xlu0 %199
    %203 = vset.pattern.permute.xlu0 0
    %204 = vperm.xlu0 %203, %v170
    %v205 = vpop.permute.xlu0 %204
    %208 = vset.pattern.permute.xlu0 0
    %209 = vperm.xlu0 %208, %v171
    %v210 = vpop.permute.xlu0 %209
    %vm212 = vcmask 523264
    %v214 = vsel %vm212, %v156, 0
    %v217 = vsel %vm212, %v157, 0
    %v220 = vsel %vm212, %v158, 0
    %v223 = vsel %vm212, %v159, 0
    %v226 = vsel %vm212, %v160, 0
    %v229 = vsel %vm212, %v161, 0
    %v232 = vsel %vm212, %v162, 0
    %v235 = vsel %vm212, %v163, 0
    %237 = vmatprep.subr.mxu0 0.0
    %238 = vmatpush1.msra.mxu0 0.0
    %239 = vmatprep.subr.mxu0 0.0
    %240 = vmatpush1.msra.mxu0 0.0
    %241 = vmatprep.subr.mxu0 0.0
    %242 = vmatpush1.msra.mxu0 0.0
    %243 = vmatprep.subr.mxu0 0.0
    %244 = vmatpush1.msra.mxu0 0.0
    %245 = vmatprep.subr.mxu0 0.0
    %246 = vmatpush1.msra.mxu0 0.0
    %247 = vmatprep.subr.mxu0 0.0
    %248 = vmatpush1.msra.mxu0 0.0
    %249 = vmatprep.subr.mxu0 0.0
    %250 = vmatpush1.msra.mxu0 0.0
    %251 = vmatprep.subr.mxu0 0.0
    %252 = vmatpush1.msra.mxu0 0.0
    %253 = vmatprep.subr.mxu0 0.0
    %254 = vmatpush1.msra.mxu0 %v155
    %255 = vmatprep.subr.mxu0 0.0
    %256 = vmatpush1.msra.mxu0 %v154
    %257 = vmatprep.subr.mxu0 0.0
    %258 = vmatpush1.msra.mxu0 %v153
    %259 = vmatprep.subr.mxu0 0.0
    %260 = vmatpush1.msra.mxu0 %v152
    %261 = vmatprep.subr.mxu0 0.0
    %262 = vmatpush1.msra.mxu0 %v151
    %263 = vmatprep.subr.mxu0 0.0
    %264 = vmatpush1.msra.mxu0 %v150
    %265 = vmatprep.subr.mxu0 0.0
    %266 = vmatpush1.msra.mxu0 %v149
    %267 = vmatprep.subr.mxu0 0.0
    %268 = vmatpush1.msra.mxu0 %v148
    %269 = vmatprep.subr.mxu0 0.0
    %270 = vmatpush2.msra.mxu0 0.0
    %271 = vmatprep.subr.mxu0 0.0
    %272 = vmatpush2.msra.mxu0 0.0
    %273 = vmatprep.subr.mxu0 0.0
    %274 = vmatpush2.msra.mxu0 0.0
    %275 = vmatprep.subr.mxu0 0.0
    %276 = vmatpush2.msra.mxu0 0.0
    %277 = vmatprep.subr.mxu0 0.0
    %278 = vmatpush2.msra.mxu0 0.0
    %279 = vmatprep.subr.mxu0 0.0
    %280 = vmatpush2.msra.mxu0 0.0
    %281 = vmatprep.subr.mxu0 0.0
    %282 = vmatpush2.msra.mxu0 0.0
    %283 = vmatprep.subr.mxu0 0.0
    %284 = vmatpush2.msra.mxu0 0.0
    %285 = vmatprep.subr.mxu0 0.0
    %286 = vmatpush2.msra.mxu0 0.0
    %287 = vmatprep.subr.mxu0 0.0
    %288 = vmatpush2.msra.mxu0 0.0
    %289 = vmatprep.subr.mxu0 0.0
    %290 = vmatpush2.msra.mxu0 0.0
    %291 = vmatprep.subr.mxu0 0.0
    %292 = vmatpush2.msra.mxu0 0.0
    %293 = vmatprep.subr.mxu0 0.0
    %294 = vmatpush2.msra.mxu0 0.0
    %295 = vmatprep.subr.mxu0 0.0
    %296 = vmatpush2.msra.mxu0 0.0
    %297 = vmatprep.subr.mxu0 0.0
    %298 = vmatpush2.msra.mxu0 0.0
    %299 = vmatprep.subr.mxu0 0.0
    %300 = vmatpush2.msra.mxu0 0.0
    %301 = vmatprep.mubr.f32.mxu0 0.0
    %302 = vmatmul.mubr.f32.gmra.mxu0 %v214
    %v303 = vpop.f32.mrf.mxu0
    %v304 = vadd.f32 %v175, %v303
    %v305 = vpop.f32.mrf.mxu0
    %306 = vmatprep.mubr.f32.mxu0 0.0
    %307 = vmatmul.mubr.f32.gmra.mxu0 %v217
    %v308 = vpop.f32.mrf.mxu0
    %v309 = vadd.f32 %v180, %v308
    %v310 = vpop.f32.mrf.mxu0
    %311 = vmatprep.mubr.f32.mxu0 0.0
    %312 = vmatmul.mubr.f32.gmra.mxu0 %v220
    %v313 = vpop.f32.mrf.mxu0
    %v314 = vadd.f32 %v185, %v313
    %v315 = vpop.f32.mrf.mxu0
    %316 = vmatprep.mubr.f32.mxu0 0.0
    %317 = vmatmul.mubr.f32.gmra.mxu0 %v223
    %v318 = vpop.f32.mrf.mxu0
    %v319 = vadd.f32 %v190, %v318
    %v320 = vpop.f32.mrf.mxu0
    %321 = vmatprep.mubr.f32.mxu0 0.0
    %322 = vmatmul.mubr.f32.gmra.mxu0 %v226
    %v323 = vpop.f32.mrf.mxu0
    %v324 = vadd.f32 %v195, %v323
    %v325 = vpop.f32.mrf.mxu0
    %326 = vmatprep.mubr.f32.mxu0 0.0
    %327 = vmatmul.mubr.f32.gmra.mxu0 %v229
    %v328 = vpop.f32.mrf.mxu0
    %v329 = vadd.f32 %v200, %v328
    %v330 = vpop.f32.mrf.mxu0
    %331 = vmatprep.mubr.f32.mxu0 0.0
    %332 = vmatmul.mubr.f32.gmra.mxu0 %v232
    %v333 = vpop.f32.mrf.mxu0
    %v334 = vadd.f32 %v205, %v333
    %v335 = vpop.f32.mrf.mxu0
    %336 = vmatprep.mubr.f32.mxu0 0.0
    %337 = vmatmul.mubr.f32.gmra.mxu0 %v235
    %v338 = vpop.f32.mrf.mxu0
    %v339 = vadd.f32 %v210, %v338
    %v340 = vpop.f32.mrf.mxu0
    %341 = vdwg.mxu0
    %v342 = vmax.f32 %v304, 0.0
    %v343 = vmax.f32 %v309, 0.0
    %v344 = vmax.f32 %v314, 0.0
    %v345 = vmax.f32 %v319, 0.0
    %v346 = vmax.f32 %v324, 0.0
    %v347 = vmax.f32 %v329, 0.0
    %v348 = vmax.f32 %v334, 0.0
    %v349 = vmax.f32 %v339, 0.0
    %v350 = vld [vmem:[%s5] sm:$0x3]
    %v351 = vld [vmem:[%s6] sm:$0x3]
    %353 = vset.pattern.permute.xlu0 0
    %354 = vperm.xlu0 %353, %v351
    %v355 = vpop.permute.xlu0 %354
    %v358 = vsel %vm212, %v350, 0
    %360 = vmatprep.subr.mxu0 0.0
    %361 = vmatpush1.msra.mxu0 0.0
    %362 = vmatprep.subr.mxu0 0.0
    %363 = vmatpush1.msra.mxu0 0.0
    %364 = vmatprep.subr.mxu0 0.0
    %365 = vmatpush1.msra.mxu0 0.0
    %366 = vmatprep.subr.mxu0 0.0
    %367 = vmatpush1.msra.mxu0 0.0
    %368 = vmatprep.subr.mxu0 0.0
    %369 = vmatpush1.msra.mxu0 0.0
    %370 = vmatprep.subr.mxu0 0.0
    %371 = vmatpush1.msra.mxu0 0.0
    %372 = vmatprep.subr.mxu0 0.0
    %373 = vmatpush1.msra.mxu0 0.0
    %374 = vmatprep.subr.mxu0 0.0
    %375 = vmatpush1.msra.mxu0 0.0
    %376 = vmatprep.subr.mxu0 0.0
    %377 = vmatpush1.msra.mxu0 %v349
    %378 = vmatprep.subr.mxu0 0.0
    %379 = vmatpush1.msra.mxu0 %v348
    %380 = vmatprep.subr.mxu0 0.0
    %381 = vmatpush1.msra.mxu0 %v347
    %382 = vmatprep.subr.mxu0 0.0
    %383 = vmatpush1.msra.mxu0 %v346
    %384 = vmatprep.subr.mxu0 0.0
    %385 = vmatpush1.msra.mxu0 %v345
    %386 = vmatprep.subr.mxu0 0.0
    %387 = vmatpush1.msra.mxu0 %v344
    %388 = vmatprep.subr.mxu0 0.0
    %389 = vmatpush1.msra.mxu0 %v343
    %390 = vmatprep.subr.mxu0 0.0
    %391 = vmatpush1.msra.mxu0 %v342
    %392 = vmatprep.subr.mxu0 0.0
    %393 = vmatpush2.msra.mxu0 0.0
    %394 = vmatprep.subr.mxu0 0.0
    %395 = vmatpush2.msra.mxu0 0.0
    %396 = vmatprep.subr.mxu0 0.0
    %397 = vmatpush2.msra.mxu0 0.0
    %398 = vmatprep.subr.mxu0 0.0
    %399 = vmatpush2.msra.mxu0 0.0
    %400 = vmatprep.subr.mxu0 0.0
    %401 = vmatpush2.msra.mxu0 0.0
    %402 = vmatprep.subr.mxu0 0.0
    %403 = vmatpush2.msra.mxu0 0.0
    %404 = vmatprep.subr.mxu0 0.0
    %405 = vmatpush2.msra.mxu0 0.0
    %406 = vmatprep.subr.mxu0 0.0
    %407 = vmatpush2.msra.mxu0 0.0
    %408 = vmatprep.subr.mxu0 0.0
    %409 = vmatpush2.msra.mxu0 0.0
    %410 = vmatprep.subr.mxu0 0.0
    %411 = vmatpush2.msra.mxu0 0.0
    %412 = vmatprep.subr.mxu0 0.0
    %413 = vmatpush2.msra.mxu0 0.0
    %414 = vmatprep.subr.mxu0 0.0
    %415 = vmatpush2.msra.mxu0 0.0
    %416 = vmatprep.subr.mxu0 0.0
    %417 = vmatpush2.msra.mxu0 0.0
    %418 = vmatprep.subr.mxu0 0.0
    %419 = vmatpush2.msra.mxu0 0.0
    %420 = vmatprep.subr.mxu0 0.0
    %421 = vmatpush2.msra.mxu0 0.0
    %422 = vmatprep.subr.mxu0 0.0
    %423 = vmatpush2.msra.mxu0 0.0
    %424 = vmatprep.mubr.f32.mxu0 0.0
    %425 = vmatmul.mubr.f32.gmra.mxu0 %v358
    %v426 = vpop.f32.mrf.mxu0
    %v427 = vadd.f32 %v355, %v426
    %v428 = vpop.f32.mrf.mxu0
    %429 = vdwg.mxu0
    %v430 = vtanh.pop %v427
    %v431 = vmul.f32 %v430, 1.442695
    %v432 = vpow.pop %v431
    %v433 = vmul.f32 %v31, %v432
    %v435 = vrot.slane %v427, 1
    %v437 = vadd.f32 %v433, %v435
    %vm438 = vcmask 57344
    %439 = vst.msk [vmem:[#allocation2] sm:$0x1] %vm438, %v30
    %440 = vst.msk [vmem:[#allocation2 + $0x1] sm:$0x1] %vm438, %v437
    %441 = vst.msk [vmem:[#allocation4] sm:$0x1] %vm438, %v430
    // Predicated region
    $region30: #{tpu_custom_call.1} parent=1 // pred_check
      _
    $region31: #{tpu_custom_call.1} parent=1 // pred_check_branch
      %443 = sbr.rel (0) target = $region33
    $region32: #{tpu_custom_call.1} parent=1 // pred_region
      %s445 = ssub.s32 32, 32
      %446 = vsyncadd [#allocation3], %s445
      %s448 = sshll.u32 [#allocation2], 4
      %s449 = int_to_ptr.vmem [resolvable:$true] %s448
      %451 = dma.vmem_to_hbm [thread:$0]  %s449, 32, %s7, [#allocation3]
    $region33: #{tpu_custom_call.1} parent=1 // pred_fallthru
      _
    // Predicated region
    $region34: #{tpu_custom_call.1} parent=1 // pred_check
      _
    $region35: #{tpu_custom_call.1} parent=1 // pred_check_branch
      %453 = sbr.rel (0) target = $region37
    $region36: #{tpu_custom_call.1} parent=1 // pred_region
      %s455 = ssub.s32 16, 16
      %456 = vsyncadd [#allocation5], %s455
      %s458 = sshll.u32 [#allocation4], 4
      %s459 = int_to_ptr.vmem [resolvable:$true] %s458
      %461 = dma.vmem_to_hbm [thread:$0]  %s459, 16, %s8, [#allocation5]
    $region37: #{tpu_custom_call.1} parent=1 // pred_fallthru
      _
    // Predicated region
    $region38: #{tpu_custom_call.1} parent=1 // pred_check
      _
    $region39: #{tpu_custom_call.1} parent=1 // pred_check_branch
      %463 = sbr.rel (0) target = $region41
    $region40: #{tpu_custom_call.1} parent=1 // pred_region
      %464 = dma.done [#allocation3], 32
    $region41: #{tpu_custom_call.1} parent=1 // pred_fallthru
      _
    // Predicated region
    $region42: #{tpu_custom_call.1} parent=1 // pred_check
      _
    $region43: #{tpu_custom_call.1} parent=1 // pred_check_branch
      %466 = sbr.rel (0) target = $region45
    $region44: #{tpu_custom_call.1} parent=1 // pred_region
      %467 = dma.done [#allocation5], 16
    $region45: #{tpu_custom_call.1} parent=1 // pred_fallthru
      _
    %468 = vsyncpa [#allocation3], 1
    %469 = vsyncpa [#allocation5], 1

</llo_original>
